<compile_context>
chip_gen: v7x
topology: tpu7x:2x2x1
jax: 0.10.0
libtpu: 0.0.40
codegen_flags: <defaults>
</compile_context>

<pallas_src>
import jax
import jax.numpy as jnp
from jax.experimental import pallas as pl
from jax.experimental.pallas import tpu as pltpu

# ----------------------------- configuration --------------------------------
INPUT_DIM = 10          # MLP input_dim
OUTPUT_DIM = 8          # MLP output_dim
LATENT_DIM = 32         # module default latent_dim
N_HIDDEN = 1            # module default n_hidden
BATCH = 8               # demo batch (>= 8 rows -> full f32 sublane group)

IN_PAD = 16                                   # INPUT_DIM rounded up to 8-mult
N_LINEAR = N_HIDDEN + 2                       # 3 linear layers for n_hidden=1
W_ROWS = IN_PAD + (N_HIDDEN + 1) * LATENT_DIM # packed weight rows (80)
WB_ROWS = W_ROWS + N_LINEAR                   # + one bias row per layer (83)

_F32 = jnp.float32


# ------------------------------- fused kernel --------------------------------
def mlp_fused_kernel(a_ref, x_ref, wb_ref, o_ref, xpad_ref):
    """Whole MLP forward for one batch tile.

    a_ref    : (N_HIDDEN + 1,) f32 in SMEM    -- PReLU slopes (scalars)
    x_ref    : (tile_b, INPUT_DIM) f32 VMEM   -- input tile (un-padded)
    wb_ref   : (WB_ROWS, LATENT_DIM) f32 VMEM -- packed weights + biases
               rows [0, IN_PAD)                   : W1 (zero rows past INPUT_DIM)
               rows [IN_PAD + i*LAT, +LAT)        : hidden W_i
               rows [IN_PAD + N_HIDDEN*LAT, +LAT) : W_out (zero cols past OUTPUT_DIM)
               rows [W_ROWS, W_ROWS + N_LINEAR)   : biases (lane-padded with zeros)
    o_ref    : (tile_b, LATENT_DIM) f32 VMEM  -- lane-dense output
    xpad_ref : (tile_b, IN_PAD) f32 VMEM      -- scratch: x zero-padded in lanes
    """
    # Zero-fill scratch and copy x into its first INPUT_DIM lanes; pad lanes
    # stay zero and multiply against the zero rows of W1 -> exact.
    xpad_ref[...] = jnp.zeros_like(xpad_ref)
    xpad_ref[:, :INPUT_DIM] = x_ref[...]

    # Single load of all bias rows; value-slice per layer afterwards.
    biases = wb_ref[W_ROWS:W_ROWS + N_LINEAR, :]          # (N_LINEAR, LATENT_DIM)

    # ---- first Linear + PReLU ----
    h = jnp.dot(xpad_ref[...], wb_ref[0:IN_PAD, :],
                preferred_element_type=jnp.float32) + biases[0:1, :]
    a = a_ref[0]
    h = jnp.where(h > 0, h, a * h)

    # ---- hidden stack: Dropout(p=0) is identity, then Linear + PReLU ----
    for i in range(N_HIDDEN):                              # static, unrolled
        r0 = IN_PAD + i * LATENT_DIM
        h = jnp.dot(h, wb_ref[r0:r0 + LATENT_DIM, :],
                    preferred_element_type=jnp.float32) + biases[i + 1:i + 2, :]
        a = a_ref[i + 1]
        h = jnp.where(h > 0, h, a * h)

    # ---- output Linear (lane-dense store; padded cols are exactly zero) ----
    r0 = IN_PAD + N_HIDDEN * LATENT_DIM
    o_ref[...] = jnp.dot(h, wb_ref[r0:r0 + LATENT_DIM, :],
                         preferred_element_type=jnp.float32) \
                 + biases[N_LINEAR - 1:N_LINEAR, :]


# --------------------------- pallas_call wrapper ------------------------------
def _pick_batch_tile(batch):
    for t in (512, 256, 128, 64, 32, 16, 8):
        if batch % t == 0:
            return t
    return batch            # tiny / odd batch: whole batch as one block


@jax.jit
def mlp_forward(x, slopes, wb_packed):
    B = x.shape[0]
    tb = _pick_batch_tile(B)
    y = pl.pallas_call(
        mlp_fused_kernel,
        out_shape=jax.ShapeDtypeStruct((B, LATENT_DIM), _F32),
        grid=(B // tb,),
        in_specs=[
            pl.BlockSpec(memory_space=pltpu.MemorySpace.SMEM),        # slopes
            pl.BlockSpec((tb, INPUT_DIM), lambda i: (i, 0)),          # x tile
            pl.BlockSpec((WB_ROWS, LATENT_DIM), lambda i: (0, 0)),    # resident W+b
        ],
        out_specs=pl.BlockSpec((tb, LATENT_DIM), lambda i: (i, 0)),
        scratch_shapes=[pltpu.VMEM((tb, IN_PAD), _F32)],
        compiler_params=pltpu.CompilerParams(
            dimension_semantics=("parallel",)),
    )(slopes, x, wb_packed)
    # Lane-dense kernel output; trim to the real OUTPUT_DIM here (fuses in XLA).
    return y[:, :OUTPUT_DIM]


# ------------------------------ parameters -----------------------------------
def init_params(key):
    """Per-layer params (PyTorch-equivalent, W stored as (in, out)), packed
    into the kernel's single contiguous weight+bias slab."""
    dims = [INPUT_DIM] + [LATENT_DIM] * (N_HIDDEN + 1) + [OUTPUT_DIM]
    ks = jax.random.split(key, 2 * N_LINEAR)
    weights, biases = [], []
    for i in range(N_LINEAR):
        w = jax.random.normal(ks[2 * i], (dims[i], dims[i + 1]), _F32) * 0.1
        b = jax.random.normal(ks[2 * i + 1], (dims[i + 1],), _F32) * 0.1
        weights.append(w)
        biases.append(b)
    # nn.PReLU() default: single slope, init 0.25, one per PReLU layer.
    slopes = jnp.full((N_HIDDEN + 1,), 0.25, _F32)

    wb = jnp.zeros((WB_ROWS, LATENT_DIM), _F32)
    wb = wb.at[:INPUT_DIM, :].set(weights[0])                       # W1
    for i in range(N_HIDDEN):                                       # hidden W_i
        r0 = IN_PAD + i * LATENT_DIM
        wb = wb.at[r0:r0 + LATENT_DIM, :].set(weights[1 + i])
    r0 = IN_PAD + N_HIDDEN * LATENT_DIM                             # W_out
    wb = wb.at[r0:r0 + LATENT_DIM, :OUTPUT_DIM].set(weights[-1])
    for i in range(N_LINEAR):                                       # biases
        wb = wb.at[W_ROWS + i, :biases[i].shape[0]].set(biases[i])

    return dict(weights=weights, biases=biases, slopes=slopes, wb_packed=wb)


# ----------------------------- pure-JAX reference ------------------------------
def mlp_reference(x, weights, biases, slopes):
    h = x @ weights[0] + biases[0]
    h = jnp.where(h > 0, h, slopes[0] * h)
    for i in range(N_HIDDEN):
        h = h @ weights[1 + i] + biases[1 + i]
        h = jnp.where(h > 0, h, slopes[1 + i] * h)
    return h @ weights[-1] + biases[-1]


# ----------------------------------- main --------------------------------------
if __name__ == "__main__":
    key = jax.random.PRNGKey(0)
    kx, kp = jax.random.split(key)

    x = jax.random.normal(kx, (BATCH, INPUT_DIM), _F32)
    params = init_params(kp)

    out = mlp_forward(x, params["slopes"], params["wb_packed"])
    out = jax.block_until_ready(out)

    ref = mlp_reference(x, params["weights"], params["biases"],
                        params["slopes"])

    assert out.shape == (BATCH, OUTPUT_DIM)
    assert bool(jnp.all(jnp.isfinite(out)))
    assert bool(jnp.allclose(out, ref, atol=1e-5, rtol=1e-5))
    print("KERNEL_OK")
</pallas_src>

<mosaic_0001>
module attributes {stable_mosaic.version = 11 : i64} {
  func.func @mlp_fused_kernel(%arg0: i32, %arg1: memref<2xf32, #tpu.memory_space<smem>>, %arg2: memref<8x10xf32, #tpu.memory_space<vmem>>, %arg3: memref<83x32xf32, #tpu.memory_space<vmem>>, %arg4: memref<8x32xf32, #tpu.memory_space<vmem>>, %arg5: memref<8x16xf32, #tpu.memory_space<vmem>>) attributes {dimension_semantics = [#tpu.dimension_semantics<parallel>], iteration_bounds = array<i64: 1>, scalar_prefetch = 0 : i64, scratch_operands = 1 : i64, tpu.core_type = #tpu.core_type<tc>, window_params = [{transform_indices = @transform_0, window_bounds = array<i64: 2>}, {transform_indices = @transform_1, window_bounds = array<i64: 8, 10>}, {pipeline_mode = #tpu.pipeline_mode<synchronous>, transform_indices = @transform_2, window_bounds = array<i64: 83, 32>}, {transform_indices = @transform_3, window_bounds = array<i64: 8, 32>}]} {
    %cst = arith.constant 0.000000e+00 : f32
    %0 = vector.broadcast %cst : f32 to vector<8x16xf32>
    %c0 = arith.constant 0 : index
    %c0_0 = arith.constant 0 : index
    %1 = vector.load %arg5[%c0, %c0_0] : memref<8x16xf32, #tpu.memory_space<vmem>>, vector<8x16xf32>
    tpu.vector_store %arg5[%c0, %c0_0], %0 {strides = array<i32>} : memref<8x16xf32, #tpu.memory_space<vmem>>, vector<8x16xf32>,
    %c0_1 = arith.constant 0 : index
    %c0_2 = arith.constant 0 : index
    %2 = vector.load %arg2[%c0_1, %c0_2] : memref<8x10xf32, #tpu.memory_space<vmem>>, vector<8x10xf32>
    %c0_3 = arith.constant 0 : index
    %c0_4 = arith.constant 0 : index
    %3 = vector.load %arg5[%c0_3, %c0_4] : memref<8x16xf32, #tpu.memory_space<vmem>>, vector<8x10xf32>
    tpu.vector_store %arg5[%c0_3, %c0_4], %2 {strides = array<i32>} : memref<8x16xf32, #tpu.memory_space<vmem>>, vector<8x10xf32>,
    %c80 = arith.constant 80 : index
    %c0_5 = arith.constant 0 : index
    %4 = vector.load %arg3[%c80, %c0_5] : memref<83x32xf32, #tpu.memory_space<vmem>>, vector<3x32xf32>
    %c0_6 = arith.constant 0 : index
    %c0_7 = arith.constant 0 : index
    %5 = vector.load %arg5[%c0_6, %c0_7] : memref<8x16xf32, #tpu.memory_space<vmem>>, vector<8x16xf32>
    %c0_8 = arith.constant 0 : index
    %c0_9 = arith.constant 0 : index
    %6 = vector.load %arg3[%c0_8, %c0_9] : memref<83x32xf32, #tpu.memory_space<vmem>>, vector<16x32xf32>
    %cst_10 = arith.constant dense<0.000000e+00> : vector<8x32xf32>
    %7 = tpu.matmul %5, %6, %cst_10 {dimension_numbers = #tpu.dot_dimension_numbers<[1], [0], [0], [1], [0, 0, 1, 1], [], []>} : vector<8x16xf32>, vector<16x32xf32>, vector<8x32xf32> -> vector<8x32xf32>
    %8 = vector.extract_strided_slice %4 {offsets = [0, 0], sizes = [1, 32], strides = [1, 1]} : vector<3x32xf32> to vector<1x32xf32>
    %9 = vector.broadcast %8 : vector<1x32xf32> to vector<8x32xf32>
    %10 = arith.addf %7, %9 : vector<8x32xf32>
    %c0_11 = arith.constant 0 : index
    %11 = memref.load %arg1[%c0_11] : memref<2xf32, #tpu.memory_space<smem>>
    %cst_12 = arith.constant 0.000000e+00 : f32
    %12 = vector.broadcast %cst_12 : f32 to vector<8x32xf32>
    %13 = arith.cmpf ogt, %10, %12 : vector<8x32xf32>
    %14 = vector.broadcast %11 : f32 to vector<8x32xf32>
    %15 = arith.mulf %14, %10 : vector<8x32xf32>
    %16 = arith.select %13, %10, %15 : vector<8x32xi1>, vector<8x32xf32>
    %c16 = arith.constant 16 : index
    %c0_13 = arith.constant 0 : index
    %17 = vector.load %arg3[%c16, %c0_13] : memref<83x32xf32, #tpu.memory_space<vmem>>, vector<32x32xf32>
    %cst_14 = arith.constant dense<0.000000e+00> : vector<8x32xf32>
    %18 = tpu.matmul %16, %17, %cst_14 {dimension_numbers = #tpu.dot_dimension_numbers<[1], [0], [0], [1], [0, 0, 1, 1], [], []>} : vector<8x32xf32>, vector<32x32xf32>, vector<8x32xf32> -> vector<8x32xf32>
    %19 = vector.extract_strided_slice %4 {offsets = [1, 0], sizes = [1, 32], strides = [1, 1]} : vector<3x32xf32> to vector<1x32xf32>
    %20 = vector.broadcast %19 : vector<1x32xf32> to vector<8x32xf32>
    %21 = arith.addf %18, %20 : vector<8x32xf32>
    %c1 = arith.constant 1 : index
    %22 = memref.load %arg1[%c1] : memref<2xf32, #tpu.memory_space<smem>>
    %cst_15 = arith.constant 0.000000e+00 : f32
    %23 = vector.broadcast %cst_15 : f32 to vector<8x32xf32>
    %24 = arith.cmpf ogt, %21, %23 : vector<8x32xf32>
    %25 = vector.broadcast %22 : f32 to vector<8x32xf32>
    %26 = arith.mulf %25, %21 : vector<8x32xf32>
    %27 = arith.select %24, %21, %26 : vector<8x32xi1>, vector<8x32xf32>
    %c48 = arith.constant 48 : index
    %c0_16 = arith.constant 0 : index
    %28 = vector.load %arg3[%c48, %c0_16] : memref<83x32xf32, #tpu.memory_space<vmem>>, vector<32x32xf32>
    %cst_17 = arith.constant dense<0.000000e+00> : vector<8x32xf32>
    %29 = tpu.matmul %27, %28, %cst_17 {dimension_numbers = #tpu.dot_dimension_numbers<[1], [0], [0], [1], [0, 0, 1, 1], [], []>} : vector<8x32xf32>, vector<32x32xf32>, vector<8x32xf32> -> vector<8x32xf32>
    %30 = vector.extract_strided_slice %4 {offsets = [2, 0], sizes = [1, 32], strides = [1, 1]} : vector<3x32xf32> to vector<1x32xf32>
    %31 = vector.broadcast %30 : vector<1x32xf32> to vector<8x32xf32>
    %32 = arith.addf %29, %31 : vector<8x32xf32>
    %c0_18 = arith.constant 0 : index
    %c0_19 = arith.constant 0 : index
    %33 = vector.load %arg4[%c0_18, %c0_19] : memref<8x32xf32, #tpu.memory_space<vmem>>, vector<8x32xf32>
    tpu.vector_store %arg4[%c0_18, %c0_19], %32 {strides = array<i32>} : memref<8x32xf32, #tpu.memory_space<vmem>>, vector<8x32xf32>,
    return
  }
  func.func @transform_0(%arg0: i32) -> i32 {
    %c0_i32 = arith.constant 0 : i32
    %c0_i32_0 = arith.constant 0 : i32
    return %c0_i32 : i32
  }
  func.func @transform_1(%arg0: i32) -> (i32, i32) {
    %c0_i32 = arith.constant 0 : i32
    %c0_i32_0 = arith.constant 0 : i32
    return %arg0, %c0_i32 : i32, i32
  }
  func.func @transform_2(%arg0: i32) -> (i32, i32) {
    %c0_i32 = arith.constant 0 : i32
    %c0_i32_0 = arith.constant 0 : i32
    %c0_i32_1 = arith.constant 0 : i32
    return %c0_i32, %c0_i32_0 : i32, i32
  }
  func.func @transform_3(%arg0: i32) -> (i32, i32) {
    %c0_i32 = arith.constant 0 : i32
    %c0_i32_0 = arith.constant 0 : i32
    return %arg0, %c0_i32 : i32, i32
  }
}

</mosaic_0001>

<llo_original>
// kernel: mlp_forward.1
$region0: #{mlp_forward.1}
  #allocation0 [shape = 'u32[]', space=smem, size = 0x4, offset = 0x4, fixed_abs, tag = 'smem constant byte address 0x4 - core index']
  #allocation1 [shape = 'u32[144,128]{1,0:T(1,128)}', space=vmem, size = 0x12000, scoped, tag = 'internal scratch']
  #allocation2 [shape = 'f32[8,16]{1,0:T(8,128)}', space=vmem, size = 0x1000, scoped, tag = 'scratch operand']
  %s0 = inlined_call_operand.vmem [shape: f32[2], index: 0, kind: input, shape index: {}]
  %s1 = inlined_call_operand.vmem [shape: f32[8,10], index: 1, kind: input, shape index: {}]
  %s2 = inlined_call_operand.vmem [shape: f32[83,32], index: 2, kind: input, shape index: {}]
  %s3 = inlined_call_operand.hbm [shape: f32[8,32], index: 3, kind: output, shape index: {}]
  %s4 = sld [smem:[#allocation0]]
  $region26: #{mlp_forward.1} parent=0
    _
  %s6 = ssub.s32 1, %s4
  %s7 = scalar_select 0, %s6, %s4
  $region1: #{mlp_forward.1} parent=0
    #allocation3 [shape = 'u8[512]{0}', space=smem, size = 0x200, scoped, tag = 'input window, operand 0, single buffered']
    #allocation4 [shape = 's32[1]{0}', space=sflag, size = 0x4, scoped, tag = 'scoped memory for mlp_forward.1']
    #allocation5 [shape = 's32[1]{0}', space=sflag, size = 0x4, scoped, tag = 'scoped memory for mlp_forward.1']
    #allocation6 [shape = 'u8[4096]{0}', space=vmem, size = 0x1000, scoped, tag = 'output window, operand 0, single buffered']
    %8 = vsyncpa [#allocation5], 0
    %9 = vsyncpa [#allocation4], 0
    // Predicated region
    $region2: #{mlp_forward.1} parent=1 // pred_check
      _
    $region3: #{mlp_forward.1} parent=1 // pred_check_branch
      %11 = sbr.rel (0) target = $region5
    $region4: #{mlp_forward.1} parent=1 // pred_region
      %s13 = ssub.s32 16, 16
      %14 = vsyncadd [#allocation5], %s13
      %s16 = sshll.u32 %s0, 4
      %s17 = int_to_ptr.vmem [resolvable:$true] %s16
      %19 = dma.vmem_to_smem %s17, 16, [#allocation3], [#allocation5]
    $region5: #{mlp_forward.1} parent=1 // pred_fallthru
      _
    // Predicated region
    $region6: #{mlp_forward.1} parent=1 // pred_check
      _
    $region7: #{mlp_forward.1} parent=1 // pred_check_branch
      %21 = sbr.rel (0) target = $region9
    $region8: #{mlp_forward.1} parent=1 // pred_region
      _
    $region9: #{mlp_forward.1} parent=1 // pred_fallthru
      _
    // Predicated region
    $region10: #{mlp_forward.1} parent=1 // pred_check
      _
    $region11: #{mlp_forward.1} parent=1 // pred_check_branch
      %23 = sbr.rel (0) target = $region13
    $region12: #{mlp_forward.1} parent=1 // pred_region
      _
    $region13: #{mlp_forward.1} parent=1 // pred_fallthru
      _
    // Predicated region
    $region14: #{mlp_forward.1} parent=1 // pred_check
      _
    $region15: #{mlp_forward.1} parent=1 // pred_check_branch
      %25 = sbr.rel (0) target = $region17
    $region16: #{mlp_forward.1} parent=1 // pred_region
      %26 = dma.done [#allocation5], 16
    $region17: #{mlp_forward.1} parent=1 // pred_fallthru
      _
    %27 = sfence
    %vm28 = vcmask 130048
    %29 = vst.msk [vmem:[#allocation2] sm:$0xff] %vm28, 0.0
    %v30 = vld [vmem:[%s1] sm:$0xff]
    %vm31 = vcmask 80896
    %32 = vst.msk [vmem:[#allocation2] sm:$0xff] %vm31, %v30
    %v33 = vld [vmem:[%s2 + $0x50] sm:$0x7]
    %v34 = vld [vmem:[#allocation2] sm:$0xff]
    %v35 = vld [vmem:[%s2] sm:$0xff]
    %v36 = vld [vmem:[%s2 + $0x8] sm:$0xff]
    %v37 = vlaneseq
    %v38 = vshrl.u32 %v37, 7
    %v39 = vsub.s32 0, %v38
    %v40 = vrot.slane %v33, %v39
    %v42 = vsel %vm28, %v34, 0
    %44 = vmatprep.subr.mxu0 0.0
    %45 = vmatpush1.msra.mxu0 %v35
    %46 = vmatprep.subr.mxu0 0.0
    %47 = vmatpush1.msra.mxu0 %v36
    %48 = vmatprep.subr.mxu0 0.0
    %49 = vmatpush1.msra.mxu0 0.0
    %50 = vmatprep.subr.mxu0 0.0
    %51 = vmatpush1.msra.mxu0 0.0
    %52 = vmatprep.subr.mxu0 0.0
    %53 = vmatpush1.msra.mxu0 0.0
    %54 = vmatprep.subr.mxu0 0.0
    %55 = vmatpush1.msra.mxu0 0.0
    %56 = vmatprep.subr.mxu0 0.0
    %57 = vmatpush1.msra.mxu0 0.0
    %58 = vmatprep.subr.mxu0 0.0
    %59 = vmatpush1.msra.mxu0 0.0
    %60 = vmatprep.subr.mxu0 0.0
    %61 = vmatpush1.msra.mxu0 0.0
    %62 = vmatprep.subr.mxu0 0.0
    %63 = vmatpush1.msra.mxu0 0.0
    %64 = vmatprep.subr.mxu0 0.0
    %65 = vmatpush1.msra.mxu0 0.0
    %66 = vmatprep.subr.mxu0 0.0
    %67 = vmatpush1.msra.mxu0 0.0
    %68 = vmatprep.subr.mxu0 0.0
    %69 = vmatpush1.msra.mxu0 0.0
    %70 = vmatprep.subr.mxu0 0.0
    %71 = vmatpush1.msra.mxu0 0.0
    %72 = vmatprep.subr.mxu0 0.0
    %73 = vmatpush1.msra.mxu0 0.0
    %74 = vmatprep.subr.mxu0 0.0
    %75 = vmatpush1.msra.mxu0 0.0
    %76 = vmatprep.subr.mxu0 0.0
    %77 = vmatpush1.msra.mxu0 0.0
    %78 = vmatprep.subr.mxu0 0.0
    %79 = vmatpush1.msra.mxu0 0.0
    %80 = vmatprep.subr.mxu0 0.0
    %81 = vmatpush1.msra.mxu0 0.0
    %82 = vmatprep.subr.mxu0 0.0
    %83 = vmatpush1.msra.mxu0 0.0
    %84 = vmatprep.subr.mxu0 0.0
    %85 = vmatpush1.msra.mxu0 0.0
    %86 = vmatprep.subr.mxu0 0.0
    %87 = vmatpush1.msra.mxu0 0.0
    %88 = vmatprep.subr.mxu0 0.0
    %89 = vmatpush1.msra.mxu0 0.0
    %90 = vmatprep.subr.mxu0 0.0
    %91 = vmatpush1.msra.mxu0 0.0
    %92 = vmatprep.subr.mxu0 0.0
    %93 = vmatpush1.msra.mxu0 0.0
    %94 = vmatprep.subr.mxu0 0.0
    %95 = vmatpush1.msra.mxu0 0.0
    %96 = vmatprep.subr.mxu0 0.0
    %97 = vmatpush1.msra.mxu0 0.0
    %98 = vmatprep.subr.mxu0 0.0
    %99 = vmatpush1.msra.mxu0 0.0
    %100 = vmatprep.subr.mxu0 0.0
    %101 = vmatpush1.msra.mxu0 0.0
    %102 = vmatprep.subr.mxu0 0.0
    %103 = vmatpush1.msra.mxu0 0.0
    %104 = vmatprep.subr.mxu0 0.0
    %105 = vmatpush1.msra.mxu0 0.0
    %106 = vmatprep.subr.mxu0 0.0
    %107 = vmatpush1.msra.mxu0 0.0
    %108 = vmatprep.mubr.f32.mxu0 0.0
    %109 = vmatmul.mubr.f32.gmra.mrb[0].mxu0 %v42
    %v110 = vpop.f32.mrb[0].mxu0
    %v111 = vadd.f32 %v40, %v110
    %v112 = vpop.f32.mrb[0].mxu0
    %113 = vdwg.mxu0
    %s114 = sld [smem:[#allocation3]]
    %vm115 = vcmp.gt.f32.partialorder %v111, 0.0
    %v116 = vstv %s114
    %v117 = vmul.f32 %v116, %v111
    %v118 = vsel %vm115, %v111, %v117
    %v119 = vld [vmem:[%s2 + $0x10] sm:$0xff]
    %v120 = vld [vmem:[%s2 + $0x18] sm:$0xff]
    %v121 = vld [vmem:[%s2 + $0x20] sm:$0xff]
    %v122 = vld [vmem:[%s2 + $0x28] sm:$0xff]
    %v123 = vlaneseq
    %v124 = vshrl.u32 %v123, 7
    %v125 = vsub.s32 1, %v124
    %v126 = vrot.slane %v33, %v125
    %vm127 = vcmask 261120
    %v129 = vsel %vm127, %v118, 0
    %131 = vmatprep.subr.mxu0 0.0
    %132 = vmatpush1.msra.mxu0 %v119
    %133 = vmatprep.subr.mxu0 0.0
    %134 = vmatpush1.msra.mxu0 %v120
    %135 = vmatprep.subr.mxu0 0.0
    %136 = vmatpush1.msra.mxu0 %v121
    %137 = vmatprep.subr.mxu0 0.0
    %138 = vmatpush1.msra.mxu0 %v122
    %139 = vmatprep.subr.mxu0 0.0
    %140 = vmatpush1.msra.mxu0 0.0
    %141 = vmatprep.subr.mxu0 0.0
    %142 = vmatpush1.msra.mxu0 0.0
    %143 = vmatprep.subr.mxu0 0.0
    %144 = vmatpush1.msra.mxu0 0.0
    %145 = vmatprep.subr.mxu0 0.0
    %146 = vmatpush1.msra.mxu0 0.0
    %147 = vmatprep.subr.mxu0 0.0
    %148 = vmatpush1.msra.mxu0 0.0
    %149 = vmatprep.subr.mxu0 0.0
    %150 = vmatpush1.msra.mxu0 0.0
    %151 = vmatprep.subr.mxu0 0.0
    %152 = vmatpush1.msra.mxu0 0.0
    %153 = vmatprep.subr.mxu0 0.0
    %154 = vmatpush1.msra.mxu0 0.0
    %155 = vmatprep.subr.mxu0 0.0
    %156 = vmatpush1.msra.mxu0 0.0
    %157 = vmatprep.subr.mxu0 0.0
    %158 = vmatpush1.msra.mxu0 0.0
    %159 = vmatprep.subr.mxu0 0.0
    %160 = vmatpush1.msra.mxu0 0.0
    %161 = vmatprep.subr.mxu0 0.0
    %162 = vmatpush1.msra.mxu0 0.0
    %163 = vmatprep.subr.mxu0 0.0
    %164 = vmatpush1.msra.mxu0 0.0
    %165 = vmatprep.subr.mxu0 0.0
    %166 = vmatpush1.msra.mxu0 0.0
    %167 = vmatprep.subr.mxu0 0.0
    %168 = vmatpush1.msra.mxu0 0.0
    %169 = vmatprep.subr.mxu0 0.0
    %170 = vmatpush1.msra.mxu0 0.0
    %171 = vmatprep.subr.mxu0 0.0
    %172 = vmatpush1.msra.mxu0 0.0
    %173 = vmatprep.subr.mxu0 0.0
    %174 = vmatpush1.msra.mxu0 0.0
    %175 = vmatprep.subr.mxu0 0.0
    %176 = vmatpush1.msra.mxu0 0.0
    %177 = vmatprep.subr.mxu0 0.0
    %178 = vmatpush1.msra.mxu0 0.0
    %179 = vmatprep.subr.mxu0 0.0
    %180 = vmatpush1.msra.mxu0 0.0
    %181 = vmatprep.subr.mxu0 0.0
    %182 = vmatpush1.msra.mxu0 0.0
    %183 = vmatprep.subr.mxu0 0.0
    %184 = vmatpush1.msra.mxu0 0.0
    %185 = vmatprep.subr.mxu0 0.0
    %186 = vmatpush1.msra.mxu0 0.0
    %187 = vmatprep.subr.mxu0 0.0
    %188 = vmatpush1.msra.mxu0 0.0
    %189 = vmatprep.subr.mxu0 0.0
    %190 = vmatpush1.msra.mxu0 0.0
    %191 = vmatprep.subr.mxu0 0.0
    %192 = vmatpush1.msra.mxu0 0.0
    %193 = vmatprep.subr.mxu0 0.0
    %194 = vmatpush1.msra.mxu0 0.0
    %195 = vmatprep.mubr.f32.mxu0 0.0
    %196 = vmatmul.mubr.f32.gmra.mrb[0].mxu0 %v129
    %v197 = vpop.f32.mrb[0].mxu0
    %v198 = vadd.f32 %v126, %v197
    %v199 = vpop.f32.mrb[0].mxu0
    %200 = vdwg.mxu0
    %s201 = sld [smem:[#allocation3 + $0x1]]
    %vm202 = vcmp.gt.f32.partialorder %v198, 0.0
    %v203 = vstv %s201
    %v204 = vmul.f32 %v203, %v198
    %v205 = vsel %vm202, %v198, %v204
    %v206 = vld [vmem:[%s2 + $0x30] sm:$0xff]
    %v207 = vld [vmem:[%s2 + $0x38] sm:$0xff]
    %v208 = vld [vmem:[%s2 + $0x40] sm:$0xff]
    %v209 = vld [vmem:[%s2 + $0x48] sm:$0xff]
    %v210 = vlaneseq
    %v211 = vshrl.u32 %v210, 7
    %v212 = vsub.s32 2, %v211
    %v213 = vrot.slane %v33, %v212
    %v215 = vsel %vm127, %v205, 0
    %217 = vmatprep.subr.mxu0 0.0
    %218 = vmatpush1.msra.mxu0 %v206
    %219 = vmatprep.subr.mxu0 0.0
    %220 = vmatpush1.msra.mxu0 %v207
    %221 = vmatprep.subr.mxu0 0.0
    %222 = vmatpush1.msra.mxu0 %v208
    %223 = vmatprep.subr.mxu0 0.0
    %224 = vmatpush1.msra.mxu0 %v209
    %225 = vmatprep.subr.mxu0 0.0
    %226 = vmatpush1.msra.mxu0 0.0
    %227 = vmatprep.subr.mxu0 0.0
    %228 = vmatpush1.msra.mxu0 0.0
    %229 = vmatprep.subr.mxu0 0.0
    %230 = vmatpush1.msra.mxu0 0.0
    %231 = vmatprep.subr.mxu0 0.0
    %232 = vmatpush1.msra.mxu0 0.0
    %233 = vmatprep.subr.mxu0 0.0
    %234 = vmatpush1.msra.mxu0 0.0
    %235 = vmatprep.subr.mxu0 0.0
    %236 = vmatpush1.msra.mxu0 0.0
    %237 = vmatprep.subr.mxu0 0.0
    %238 = vmatpush1.msra.mxu0 0.0
    %239 = vmatprep.subr.mxu0 0.0
    %240 = vmatpush1.msra.mxu0 0.0
    %241 = vmatprep.subr.mxu0 0.0
    %242 = vmatpush1.msra.mxu0 0.0
    %243 = vmatprep.subr.mxu0 0.0
    %244 = vmatpush1.msra.mxu0 0.0
    %245 = vmatprep.subr.mxu0 0.0
    %246 = vmatpush1.msra.mxu0 0.0
    %247 = vmatprep.subr.mxu0 0.0
    %248 = vmatpush1.msra.mxu0 0.0
    %249 = vmatprep.subr.mxu0 0.0
    %250 = vmatpush1.msra.mxu0 0.0
    %251 = vmatprep.subr.mxu0 0.0
    %252 = vmatpush1.msra.mxu0 0.0
    %253 = vmatprep.subr.mxu0 0.0
    %254 = vmatpush1.msra.mxu0 0.0
    %255 = vmatprep.subr.mxu0 0.0
    %256 = vmatpush1.msra.mxu0 0.0
    %257 = vmatprep.subr.mxu0 0.0
    %258 = vmatpush1.msra.mxu0 0.0
    %259 = vmatprep.subr.mxu0 0.0
    %260 = vmatpush1.msra.mxu0 0.0
    %261 = vmatprep.subr.mxu0 0.0
    %262 = vmatpush1.msra.mxu0 0.0
    %263 = vmatprep.subr.mxu0 0.0
    %264 = vmatpush1.msra.mxu0 0.0
    %265 = vmatprep.subr.mxu0 0.0
    %266 = vmatpush1.msra.mxu0 0.0
    %267 = vmatprep.subr.mxu0 0.0
    %268 = vmatpush1.msra.mxu0 0.0
    %269 = vmatprep.subr.mxu0 0.0
    %270 = vmatpush1.msra.mxu0 0.0
    %271 = vmatprep.subr.mxu0 0.0
    %272 = vmatpush1.msra.mxu0 0.0
    %273 = vmatprep.subr.mxu0 0.0
    %274 = vmatpush1.msra.mxu0 0.0
    %275 = vmatprep.subr.mxu0 0.0
    %276 = vmatpush1.msra.mxu0 0.0
    %277 = vmatprep.subr.mxu0 0.0
    %278 = vmatpush1.msra.mxu0 0.0
    %279 = vmatprep.subr.mxu0 0.0
    %280 = vmatpush1.msra.mxu0 0.0
    %281 = vmatprep.mubr.f32.mxu0 0.0
    %282 = vmatmul.mubr.f32.gmra.mrb[0].mxu0 %v215
    %v283 = vpop.f32.mrb[0].mxu0
    %v284 = vadd.f32 %v213, %v283
    %v285 = vpop.f32.mrb[0].mxu0
    %286 = vdwg.mxu0
    %287 = vst.msk [vmem:[#allocation6] sm:$0xff] %vm127, %v284
    // Predicated region
    $region18: #{mlp_forward.1} parent=1 // pred_check
      _
    $region19: #{mlp_forward.1} parent=1 // pred_check_branch
      %289 = sbr.rel (0) target = $region21
    $region20: #{mlp_forward.1} parent=1 // pred_region
      %s291 = ssub.s32 128, 128
      %292 = vsyncadd [#allocation4], %s291
      %s294 = sshll.u32 [#allocation6], 4
      %s295 = int_to_ptr.vmem [resolvable:$true] %s294
      %297 = dma.vmem_to_hbm [thread:$0]  %s295, 128, %s3, [#allocation4]
    $region21: #{mlp_forward.1} parent=1 // pred_fallthru
      _
    // Predicated region
    $region22: #{mlp_forward.1} parent=1 // pred_check
      _
    $region23: #{mlp_forward.1} parent=1 // pred_check_branch
      %299 = sbr.rel (0) target = $region25
    $region24: #{mlp_forward.1} parent=1 // pred_region
      %300 = dma.done [#allocation4], 128
    $region25: #{mlp_forward.1} parent=1 // pred_fallthru
      _
    %301 = vsyncpa [#allocation4], 1
    %302 = vsyncpa [#allocation5], 1

</llo_original>
